<compile_context>
chip_gen: v5e
topology: v5e:2x2
jax: 0.10.0
libtpu: 0.0.40
codegen_flags: <defaults>
</compile_context>

<pallas_src>
import jax
import jax.numpy as jnp
from jax.experimental import pallas as pl
from jax.experimental.pallas import tpu as pltpu


def _round_up(x, m):
    return (x + m - 1) // m * m


def _vmem_budget_bytes():
    """Physical VMEM of the current TPU generation, with ~25% headroom."""
    try:
        cap = int(getattr(pltpu.get_tpu_info(), "vmem_capacity_bytes", 64 << 20))
    except Exception:
        cap = 64 << 20          # conservative fallback (v7x per-TC VMEM)
    return max(int(cap * 0.75), 16 << 20)


def convx_kernel(x_ref, w_ref, b_ref, o_ref):
    """One (batch, row-tile, cout-tile) step: single MXU dot + BN bias + ReLU.

    x_ref: (TH*W, Ctap) bf16  -- full K*K im2col'd input rows (lane-padded)
    w_ref: (Ctap, TCO)  bf16  -- BN scale folded into the conv weights
    b_ref: (1, TCO)     f32   -- folded BN bias
    o_ref: (TH*W, TCO)        -- flattened, lane-dense output tile
    """
    acc = jnp.dot(x_ref[...], w_ref[...], preferred_element_type=jnp.float32)
    o_ref[...] = jnp.maximum(acc + b_ref[...], 0.0).astype(o_ref.dtype)


def convx_forward(x_nchw, weight_oihw, gamma, beta, running_mean, running_var,
                  eps=1e-5, tile_h=32, compute_dtype=jnp.bfloat16,
                  out_dtype=None):
    """relu(bn(conv(x))) in eval mode. NCHW in / NCHW out, like the PyTorch module."""
    N, Cin, H, W = x_nchw.shape
    Cout, _, K, _ = weight_oihw.shape
    pad = K // 2
    out_dtype = x_nchw.dtype if out_dtype is None else out_dtype

    # ---- fold eval-mode BN into the conv: y = conv(x, w*scale) + bias --------
    scale = gamma / jnp.sqrt(running_var + eps)                    # (Cout,)
    bias = beta - running_mean * scale                             # (Cout,)
    w_hwio = jnp.transpose(weight_oihw, (2, 3, 1, 0)) * scale      # (K,K,Cin,Cout)

    # ---- NCHW -> NHWC, spatial zero-pad, FULL K*K im2col ----------------------
    # x_col[n,h,w,(ky*K+kx)*Cin+c] = x_pad[n,h+ky,w+kx,c]; the conv collapses to
    # one matmul per tile and no halo rows are ever DMA'd.
    x = jnp.transpose(x_nchw, (0, 2, 3, 1))                        # (N,H,W,Cin)
    x = jnp.pad(x, ((0, 0), (pad, pad), (pad, pad), (0, 0)))       # (N,H+2p,W+2p,Cin)
    cols = [x[:, ky:ky + H, kx:kx + W, :] for ky in range(K) for kx in range(K)]
    x_col = jnp.concatenate(cols, axis=-1)                         # (N,H,W,K*K*Cin)

    Ctap = _round_up(K * K * Cin, 128)
    Coutp = _round_up(Cout, 128)
    cbytes = jnp.dtype(compute_dtype).itemsize
    obytes = jnp.dtype(out_dtype).itemsize
    budget = _vmem_budget_bytes()

    def per_step_bytes(th, tco):
        # double-buffered input + output + weight slab + bias
        return 2 * (th * W * Ctap * cbytes
                    + th * W * tco * obytes
                    + Ctap * tco * cbytes
                    + tco * 4)

    # ---- tile sizes ------------------------------------------------------------
    TH = min(_round_up(H, 8), _round_up(max(tile_h, 8), 8))
    while TH > 8 and per_step_bytes(TH, 128) > budget:
        TH -= 8
    TCO = 128
    for cand in (Coutp, 512, 256, 128):
        if cand <= Coutp and Coutp % cand == 0 and per_step_bytes(TH, cand) <= budget:
            TCO = cand
            break
    Hpad = _round_up(H, TH)
    nT = Hpad // TH
    nJ = Coutp // TCO

    # ---- pad & flatten operands (single wrapper materialization) --------------
    x_col = jnp.pad(x_col, ((0, 0), (0, Hpad - H), (0, 0),
                            (0, Ctap - K * K * Cin)))
    x_col = x_col.reshape(N, Hpad * W, Ctap).astype(compute_dtype)

    w2 = w_hwio.reshape(K * K * Cin, Cout)
    w2 = jnp.pad(w2, ((0, Ctap - K * K * Cin), (0, Coutp - Cout)))
    w2 = w2.astype(compute_dtype)                                  # (Ctap, Coutp)
    bias2 = jnp.pad(bias, (0, Coutp - Cout)).reshape(1, Coutp).astype(jnp.float32)

    vmem_limit = int(min(max(per_step_bytes(TH, TCO) + (8 << 20), 16 << 20),
                         budget))

    out_flat = pl.pallas_call(
        convx_kernel,
        out_shape=jax.ShapeDtypeStruct((N, Hpad * W, Coutp), out_dtype),
        grid_spec=pltpu.PrefetchScalarGridSpec(
            num_scalar_prefetch=0,
            # cout-tile axis innermost: the big input tile (index map ignores j)
            # stays resident in VMEM; only the small weight slab streams.
            grid=(N, nT, nJ),
            in_specs=[
                pl.BlockSpec((None, TH * W, Ctap), lambda n, t, j: (n, t, 0)),
                pl.BlockSpec((Ctap, TCO), lambda n, t, j: (0, j)),
                pl.BlockSpec((1, TCO), lambda n, t, j: (0, j)),
            ],
            out_specs=pl.BlockSpec((None, TH * W, TCO),
                                   lambda n, t, j: (n, t, j)),
        ),
        compiler_params=pltpu.CompilerParams(
            # All axes data-parallel -> megacore sharding on multi-TC chips.
            dimension_semantics=("parallel", "parallel", "parallel"),
            vmem_limit_bytes=vmem_limit),
    )(x_col, w2, bias2)

    out = out_flat.reshape(N, Hpad, W, Coutp)[:, :H, :, :Cout]
    return jnp.transpose(out, (0, 3, 1, 2))                        # back to NCHW


def reference_forward(x_nchw, weight_oihw, gamma, beta, running_mean,
                      running_var, eps=1e-5):
    """Pure-JAX f32 reference (lax conv) matching the PyTorch module in eval mode."""
    y = jax.lax.conv_general_dilated(
        x_nchw, weight_oihw, window_strides=(1, 1), padding="SAME",
        dimension_numbers=("NCHW", "OIHW", "NCHW"))
    scale = (gamma / jnp.sqrt(running_var + eps)).reshape(1, -1, 1, 1)
    bias = (beta - running_mean * gamma /
            jnp.sqrt(running_var + eps)).reshape(1, -1, 1, 1)
    return jnp.maximum(y * scale + bias, 0.0)


if __name__ == "__main__":
    key = jax.random.PRNGKey(0)
    N, Cin, Cout, H, W, K = 2, 4, 8, 16, 16, 3

    k1, k2, k3, k4, k5, k6 = jax.random.split(key, 6)
    x = jax.random.normal(k1, (N, Cin, H, W), dtype=jnp.float32)
    weight = jax.random.normal(k2, (Cout, Cin, K, K), dtype=jnp.float32) * 0.1
    gamma = 1.0 + 0.1 * jax.random.normal(k3, (Cout,), dtype=jnp.float32)
    beta = 0.1 * jax.random.normal(k4, (Cout,), dtype=jnp.float32)
    running_mean = 0.1 * jax.random.normal(k5, (Cout,), dtype=jnp.float32)
    running_var = jnp.abs(1.0 + 0.1 * jax.random.normal(k6, (Cout,),
                                                        dtype=jnp.float32))

    out = jax.jit(convx_forward)(x, weight, gamma, beta, running_mean,
                                 running_var)
    out = jax.block_until_ready(out)

    ref = reference_forward(x, weight, gamma, beta, running_mean, running_var)
    assert out.shape == (N, Cout, H, W)
    # bf16 MXU operands (f32 accumulate) vs f32 reference -> loosened tolerance.
    assert jnp.allclose(out, ref, atol=5e-2, rtol=5e-2), (
        float(jnp.max(jnp.abs(out - ref))))

    print("KERNEL_OK")
</pallas_src>

<mosaic_0001>
module attributes {stable_mosaic.version = 11 : i64} {
  func.func @convx_kernel(%arg0: i32, %arg1: i32, %arg2: i32, %arg3: memref<1x256x128xbf16, #tpu.memory_space<vmem>>, %arg4: memref<128x128xbf16, #tpu.memory_space<vmem>>, %arg5: memref<1x128xf32, #tpu.memory_space<vmem>>, %arg6: memref<1x256x128xf32, #tpu.memory_space<vmem>>) attributes {dimension_semantics = [#tpu.dimension_semantics<parallel>, #tpu.dimension_semantics<parallel>, #tpu.dimension_semantics<parallel>], iteration_bounds = array<i64: 2, 1, 1>, scalar_prefetch = 0 : i64, scratch_operands = 0 : i64, tpu.core_type = #tpu.core_type<tc>, window_params = [{transform_indices = @transform_0, window_bounds = array<i64: 1, 256, 128>}, {transform_indices = @transform_1, window_bounds = array<i64: 128, 128>}, {transform_indices = @transform_2, window_bounds = array<i64: 1, 128>}, {transform_indices = @transform_3, window_bounds = array<i64: 1, 256, 128>}]} {
    %c0 = arith.constant 0 : index
    %c0_0 = arith.constant 0 : index
    %c0_1 = arith.constant 0 : index
    %0 = vector.load %arg3[%c0, %c0_0, %c0_1] : memref<1x256x128xbf16, #tpu.memory_space<vmem>>, vector<1x256x128xbf16>
    %1 = vector.shape_cast %0 : vector<1x256x128xbf16> to vector<256x128xbf16>
    %c0_2 = arith.constant 0 : index
    %c0_3 = arith.constant 0 : index
    %2 = vector.load %arg4[%c0_2, %c0_3] : memref<128x128xbf16, #tpu.memory_space<vmem>>, vector<128x128xbf16>
    %cst = arith.constant dense<0.000000e+00> : vector<256x128xf32>
    %3 = tpu.matmul %1, %2, %cst {dimension_numbers = #tpu.dot_dimension_numbers<[1], [0], [0], [1], [0, 0, 1, 1], [], []>} : vector<256x128xbf16>, vector<128x128xbf16>, vector<256x128xf32> -> vector<256x128xf32>
    %c0_4 = arith.constant 0 : index
    %c0_5 = arith.constant 0 : index
    %4 = vector.load %arg5[%c0_4, %c0_5] : memref<1x128xf32, #tpu.memory_space<vmem>>, vector<1x128xf32>
    %5 = vector.broadcast %4 : vector<1x128xf32> to vector<256x128xf32>
    %6 = arith.addf %3, %5 : vector<256x128xf32>
    %cst_6 = arith.constant 0.000000e+00 : f32
    %7 = vector.broadcast %cst_6 : f32 to vector<256x128xf32>
    %8 = arith.maximumf %6, %7 : vector<256x128xf32>
    %c0_7 = arith.constant 0 : index
    %c0_8 = arith.constant 0 : index
    %c0_9 = arith.constant 0 : index
    %9 = vector.load %arg6[%c0_7, %c0_8, %c0_9] : memref<1x256x128xf32, #tpu.memory_space<vmem>>, vector<1x256x128xf32>
    %10 = vector.shape_cast %9 : vector<1x256x128xf32> to vector<256x128xf32>
    %11 = vector.shape_cast %8 : vector<256x128xf32> to vector<1x256x128xf32>
    tpu.vector_store %arg6[%c0_7, %c0_8, %c0_9], %11 {strides = array<i32>} : memref<1x256x128xf32, #tpu.memory_space<vmem>>, vector<1x256x128xf32>,
    return
  }
  func.func @transform_0(%arg0: i32, %arg1: i32, %arg2: i32) -> (i32, i32, i32) {
    %c0_i32 = arith.constant 0 : i32
    %c0_i32_0 = arith.constant 0 : i32
    return %arg0, %arg1, %c0_i32 : i32, i32, i32
  }
  func.func @transform_1(%arg0: i32, %arg1: i32, %arg2: i32) -> (i32, i32) {
    %c0_i32 = arith.constant 0 : i32
    %c0_i32_0 = arith.constant 0 : i32
    return %c0_i32, %arg2 : i32, i32
  }
  func.func @transform_2(%arg0: i32, %arg1: i32, %arg2: i32) -> (i32, i32) {
    %c0_i32 = arith.constant 0 : i32
    %c0_i32_0 = arith.constant 0 : i32
    return %c0_i32, %arg2 : i32, i32
  }
  func.func @transform_3(%arg0: i32, %arg1: i32, %arg2: i32) -> (i32, i32, i32) {
    %c0_i32 = arith.constant 0 : i32
    return %arg0, %arg1, %arg2 : i32, i32, i32
  }
}

</mosaic_0001>

<llo_original>
// kernel: convx_forward.1
$region0: #{convx_forward.1}
  #allocation0 [shape = 'u32[]', space=smem, size = 0x4, offset = 0x4, fixed_abs, tag = 'smem constant byte address 0x4 - core index']
  #allocation1 [shape = 'u32[72,128]{1,0:T(1,128)}', space=vmem, size = 0x9000, scoped, tag = 'internal scratch']
  %s0 = inlined_call_operand.vmem [shape: bf16[2,256,128], index: 0, kind: input, shape index: {}]
  %s1 = inlined_call_operand.vmem [shape: bf16[128,128], index: 1, kind: input, shape index: {}]
  %s2 = inlined_call_operand.vmem [shape: f32[1,128], index: 2, kind: input, shape index: {}]
  %s3 = inlined_call_operand.vmem [shape: f32[2,256,128], index: 3, kind: output, shape index: {}]
  %s4 = sld [smem:[#allocation0]]
  $region45: #{convx_forward.1} parent=0
    _
  %s6 = ssub.s32 1, %s4
  %s7 = scalar_select 0, %s6, %s4
  loop: start=0, step=1, limit=4
  $region2: #{convx_forward.1} parent=0 // loop_pre_header
    _
  $region3: #{convx_forward.1} parent=0 // loop_header
    %s9 = sphi 0, %s13
    %p10 = scmp.ge.s32.totalorder %s9, 4
    %s16 = sphi 0, %s35
    %s17 = sphi 0, %s31
    %s18 = sphi 0, %s27
    %s19 = sphi 0, %s16
    %s20 = sphi 0, %s17
    %s21 = sphi 0, %s18
    %s22 = sphi 0, %s19
    %s23 = sphi 0, %s20
    %s24 = sphi 0, %s21
    %s40 = sphi 0, %s42
    %s43 = sphi 0, %s40
    %s44 = sphi 0, %s43
    %s60 = sphi 0, %s44
    %s66 = sphi 0, %s68
    %s69 = sphi 0, %s66
    %s70 = sphi 0, %s69
    %s86 = sphi 0, %s70
    %s92 = sphi 0, %s94
    %s95 = sphi 0, %s92
    %s96 = sphi 0, %s95
    %s112 = sphi 0, %s96
    %s122 = sphi 0, %s124
    %s125 = sphi 0, %s122
    %s126 = sphi 0, %s125
    %s142 = sphi 0, %s126
  $region4: #{convx_forward.1} parent=0 // loop_header_branch
    %12 = sbr.rel (%p10) target = $region8
  $region5: #{convx_forward.1} parent=0 // loop_body
    %s14 = ssub.s32 %s9, 1
    %s15 = ssub.s32 %s9, 2
    %s25 = sadd.s32 1, %s18
    %p26 = scmp.ge.s32.totalorder %s25, 1
    %s27 = scalar_select %p26, 0, %s25
    %s28 = sadd.s32 1, %s17
    %s29 = scalar_select %p26, %s28, %s17
    %p30 = scmp.ge.s32.totalorder %s29, 1
    %s31 = scalar_select %p30, 0, %s29
    %s32 = sadd.s32 1, %s16
    %s33 = scalar_select %p30, %s32, %s16
    %p34 = scmp.ge.s32.totalorder %s33, 2
    %s35 = scalar_select %p34, 0, %s33
    %s36 = ssub.s32 %s16, %s35
    %s37 = ssub.s32 %s17, %s31
    %s38 = sor.u32 %s36, %s37
    %p39 = scmp.eq.s32.totalorder %s38, 0
    %s41 = sadd.s32 %s40, 1
    %s42 = scalar_select %p39, %s40, %s41
    %p45 = pneg %p39
    %p46 = scmp.eq.s32.totalorder %s9, 1
    %p47 = por %p45, %p46
    %p48 = scmp.ne.s32.totalorder %s40, %s43
    %p49 = scmp.eq.s32.totalorder %s9, 0
    %p50 = por %p48, %p49
    %p51 = scmp.ne.s32.totalorder %s40, %s43
    %p52 = scmp.eq.s32.totalorder %s14, 1
    %p53 = por %p51, %p52
    %p54 = scmp.ne.s32.totalorder %s43, %s44
    %p55 = scmp.eq.s32.totalorder %s14, 0
    %p56 = por %p54, %p55
    %p57 = scmp.ne.s32.totalorder %s43, %s44
    %p58 = scmp.eq.s32.totalorder %s15, 1
    %p59 = por %p57, %p58
    %p61 = scmp.ne.s32.totalorder %s44, %s60
    %p62 = scmp.eq.s32.totalorder %s15, 0
    %p63 = por %p61, %p62
    %s64 = ssub.s32 %s18, %s27
    %p65 = scmp.eq.s32.totalorder %s64, 0
    %s67 = sadd.s32 %s66, 1
    %s68 = scalar_select %p65, %s66, %s67
    %p71 = pneg %p65
    %p72 = scmp.eq.s32.totalorder %s9, 1
    %p73 = por %p71, %p72
    %p74 = scmp.ne.s32.totalorder %s66, %s69
    %p75 = scmp.eq.s32.totalorder %s9, 0
    %p76 = por %p74, %p75
    %p77 = scmp.ne.s32.totalorder %s66, %s69
    %p78 = scmp.eq.s32.totalorder %s14, 1
    %p79 = por %p77, %p78
    %p80 = scmp.ne.s32.totalorder %s69, %s70
    %p81 = scmp.eq.s32.totalorder %s14, 0
    %p82 = por %p80, %p81
    %p83 = scmp.ne.s32.totalorder %s69, %s70
    %p84 = scmp.eq.s32.totalorder %s15, 1
    %p85 = por %p83, %p84
    %p87 = scmp.ne.s32.totalorder %s70, %s86
    %p88 = scmp.eq.s32.totalorder %s15, 0
    %p89 = por %p87, %p88
    %s90 = ssub.s32 %s18, %s27
    %p91 = scmp.eq.s32.totalorder %s90, 0
    %s93 = sadd.s32 %s92, 1
    %s94 = scalar_select %p91, %s92, %s93
    %p97 = pneg %p91
    %p98 = scmp.eq.s32.totalorder %s9, 1
    %p99 = por %p97, %p98
    %p100 = scmp.ne.s32.totalorder %s92, %s95
    %p101 = scmp.eq.s32.totalorder %s9, 0
    %p102 = por %p100, %p101
    %p103 = scmp.ne.s32.totalorder %s92, %s95
    %p104 = scmp.eq.s32.totalorder %s14, 1
    %p105 = por %p103, %p104
    %p106 = scmp.ne.s32.totalorder %s95, %s96
    %p107 = scmp.eq.s32.totalorder %s14, 0
    %p108 = por %p106, %p107
    %p109 = scmp.ne.s32.totalorder %s95, %s96
    %p110 = scmp.eq.s32.totalorder %s15, 1
    %p111 = por %p109, %p110
    %p113 = scmp.ne.s32.totalorder %s96, %s112
    %p114 = scmp.eq.s32.totalorder %s15, 0
    %p115 = por %p113, %p114
    %s116 = ssub.s32 %s16, %s35
    %s117 = ssub.s32 %s17, %s31
    %s118 = sor.u32 %s116, %s117
    %s119 = ssub.s32 %s18, %s27
    %s120 = sor.u32 %s118, %s119
    %p121 = scmp.eq.s32.totalorder %s120, 0
    %s123 = sadd.s32 %s122, 1
    %s124 = scalar_select %p121, %s122, %s123
    %p127 = pneg %p121
    %p128 = scmp.eq.s32.totalorder %s9, 1
    %p129 = por %p127, %p128
    %p130 = scmp.ne.s32.totalorder %s122, %s125
    %p131 = scmp.eq.s32.totalorder %s9, 0
    %p132 = por %p130, %p131
    %p133 = scmp.ne.s32.totalorder %s122, %s125
    %p134 = scmp.eq.s32.totalorder %s14, 1
    %p135 = por %p133, %p134
    %p136 = scmp.ne.s32.totalorder %s125, %s126
    %p137 = scmp.eq.s32.totalorder %s14, 0
    %p138 = por %p136, %p137
    %p139 = scmp.ne.s32.totalorder %s125, %s126
    %p140 = scmp.eq.s32.totalorder %s15, 1
    %p141 = por %p139, %p140
    %p143 = scmp.ne.s32.totalorder %s126, %s142
    %p144 = scmp.eq.s32.totalorder %s15, 0
    %p145 = por %p143, %p144
    %p146 = scmp.le.s32.totalorder 1, %s9
    %p147 = scmp.lt.s32.totalorder %s9, 3
    %p148 = pnand %p146, %p147
    %p149 = pneg %p148
    // Predicated region
    $region9: #{convx_forward.1} parent=5 // pred_check
      _
    $region10: #{convx_forward.1} parent=5 // pred_check_branch
      %151 = sbr.rel (%p148) target = $region12
    $region11: #{convx_forward.1} parent=5 // pred_region
      %s152 = ssub.s32 %s9, 1
      // Predicated region
      $region13: #{convx_forward.1} parent=11 // pred_check
        %p153 = pneg %p82
      $region14: #{convx_forward.1} parent=11 // pred_check_branch
        %155 = sbr.rel (%p153) target = $region16
      $region15: #{convx_forward.1} parent=11 // pred_region
        %p156 = scmp.lt.s32.totalorder %s21, 0
        %s157 = scalar_select %p156, %s21, 0
        %s158 = smul.addr %s157, 4
        %s159 = scalar_lea.vmem %s1, %s158
      $region16: #{convx_forward.1} parent=11 // pred_fallthru
        _
      // Predicated region
      $region17: #{convx_forward.1} parent=11 // pred_check
        %p160 = pneg %p108
      $region18: #{convx_forward.1} parent=11 // pred_check_branch
        %162 = sbr.rel (%p160) target = $region20
      $region19: #{convx_forward.1} parent=11 // pred_region
        %p163 = scmp.lt.s32.totalorder %s21, 0
        %s164 = scalar_select %p163, %s21, 0
        %s165 = scalar_lea.vmem %s2, %s164
      $region20: #{convx_forward.1} parent=11 // pred_fallthru
        _
    $region12: #{convx_forward.1} parent=5 // pred_fallthru
      _
    %p166 = scmp.lt.s32.totalorder %s9, 2
    // Predicated region
    $region21: #{convx_forward.1} parent=5 // pred_check
      %p167 = pneg %p166
    $region22: #{convx_forward.1} parent=5 // pred_check_branch
      %169 = sbr.rel (%p167) target = $region24
    $region23: #{convx_forward.1} parent=5 // pred_region
      // Predicated region
      $region25: #{convx_forward.1} parent=23 // pred_check
        %p170 = pneg %p50
      $region26: #{convx_forward.1} parent=23 // pred_check_branch
        %172 = sbr.rel (%p170) target = $region28
      $region27: #{convx_forward.1} parent=23 // pred_region
        %s173 = smul.u32 32, %s17
        %p174 = scmp.lt.s32.totalorder %s16, 1
        %s175 = scalar_select %p174, %s16, 1
        %p176 = scmp.lt.s32.totalorder %s173, 31
        %s177 = scalar_select %p176, %s173, 31
        %s178 = smul.addr %s175, 32
        %s179 = sadd.s32 %s177, %s178
        %s180 = smul.addr %s179, 4
        %s181 = scalar_lea.vmem %s0, %s180
        %s182 = smul.u32 32, %s17
      $region28: #{convx_forward.1} parent=23 // pred_fallthru
        _
    $region24: #{convx_forward.1} parent=5 // pred_fallthru
      _
    %p183 = scmp.le.s32.totalorder 1, %s9
    %p184 = scmp.lt.s32.totalorder %s9, 3
    %p185 = pnand %p183, %p184
    %p186 = pneg %p185
    // Predicated region
    $region29: #{convx_forward.1} parent=5 // pred_check
      _
    $region30: #{convx_forward.1} parent=5 // pred_check_branch
      %188 = sbr.rel (%p185) target = $region32
    $region31: #{convx_forward.1} parent=5 // pred_region
      %s189 = ssub.s32 %s9, 1
      %s190 = smul.u32 32, %s20
      %p191 = scmp.lt.s32.totalorder %s19, 1
      %s192 = scalar_select %p191, %s19, 1
      %p193 = scmp.lt.s32.totalorder %s190, 31
      %s194 = scalar_select %p193, %s190, 31
      %s195 = smul.addr %s192, 32
      %s196 = sadd.s32 %s194, %s195
      %s197 = smul.addr %s196, 4
      %s198 = scalar_lea.vmem %s0, %s197
      %p199 = pneg %p56
      %p200 = pneg %p53
      %p201 = scmp.lt.s32.totalorder %s21, 0
      %s202 = scalar_select %p201, %s21, 0
      %s203 = smul.addr %s202, 4
      %s204 = scalar_lea.vmem %s1, %s203
      %p205 = pneg %p82
      %p206 = pneg %p79
      %p207 = scmp.lt.s32.totalorder %s21, 0
      %s208 = scalar_select %p207, %s21, 0
      %s209 = scalar_lea.vmem %s2, %s208
      %p210 = pneg %p108
      %p211 = pneg %p105
      %p212 = pneg %p138
      %p213 = pneg %p135
      %s214 = smul.u32 32, %s20
      %p215 = scmp.lt.s32.totalorder %s19, 1
      %s216 = scalar_select %p215, %s19, 1
      %p217 = scmp.lt.s32.totalorder %s214, 31
      %s218 = scalar_select %p217, %s214, 31
      %p219 = scmp.lt.s32.totalorder %s21, 0
      %s220 = scalar_select %p219, %s21, 0
      %s221 = sadd.s32 %s220, %s218
      %s222 = smul.addr %s216, 32
      %s223 = sadd.s32 %s221, %s222
      %s224 = smul.addr %s223, 8
      %s225 = scalar_lea.vmem %s3, %s224
      %s226 = smul.u32 32, %s20
      %p227 = scmp.lt.s32.totalorder %s19, 1
      %s228 = scalar_select %p227, %s19, 1
      %p229 = scmp.lt.s32.totalorder %s226, 31
      %s230 = scalar_select %p229, %s226, 31
      %s231 = smul.addr %s228, 32
      %s232 = sadd.s32 %s230, %s231
      %s233 = smul.addr %s232, 4
      %s234 = scalar_lea.vmem %s0, %s233
      %s235 = smul.u32 32, %s20
      %p236 = scmp.lt.s32.totalorder %s21, 0
      %s237 = scalar_select %p236, %s21, 0
      %s238 = smul.addr %s237, 4
      %s239 = scalar_lea.vmem %s1, %s238
      %p240 = scmp.lt.s32.totalorder %s21, 0
      %s241 = scalar_select %p240, %s21, 0
      %s242 = scalar_lea.vmem %s2, %s241
      %s243 = smul.u32 32, %s20
      %p244 = scmp.lt.s32.totalorder %s19, 1
      %s245 = scalar_select %p244, %s19, 1
      %p246 = scmp.lt.s32.totalorder %s243, 31
      %s247 = scalar_select %p246, %s243, 31
      %p248 = scmp.lt.s32.totalorder %s21, 0
      %s249 = scalar_select %p248, %s21, 0
      %s250 = sadd.s32 %s249, %s247
      %s251 = smul.addr %s245, 32
      %s252 = sadd.s32 %s250, %s251
      %s253 = smul.addr %s252, 8
      %s254 = scalar_lea.vmem %s3, %s253
      %s255 = smul.u32 32, %s20
      %v256 = vld [vmem:[%s234] sm:$0xf]
      %v257 = vld [vmem:[%s234 + $0x4] sm:$0xf]
      %v258 = vld [vmem:[%s234 + $0x8] sm:$0xf]
      %v259 = vld [vmem:[%s234 + $0xc] sm:$0xf]
      %v260 = vld [vmem:[%s234 + $0x10] sm:$0xf]
      %v261 = vld [vmem:[%s234 + $0x14] sm:$0xf]
      %v262 = vld [vmem:[%s234 + $0x18] sm:$0xf]
      %v263 = vld [vmem:[%s234 + $0x1c] sm:$0xf]
      %v264 = vld [vmem:[%s234 + $0x20] sm:$0xf]
      %v265 = vld [vmem:[%s234 + $0x24] sm:$0xf]
      %v266 = vld [vmem:[%s234 + $0x28] sm:$0xf]
      %v267 = vld [vmem:[%s234 + $0x2c] sm:$0xf]
      %v268 = vld [vmem:[%s234 + $0x30] sm:$0xf]
      %v269 = vld [vmem:[%s234 + $0x34] sm:$0xf]
      %v270 = vld [vmem:[%s234 + $0x38] sm:$0xf]
      %v271 = vld [vmem:[%s234 + $0x3c] sm:$0xf]
      %v272 = vld [vmem:[%s234 + $0x40] sm:$0xf]
      %v273 = vld [vmem:[%s234 + $0x44] sm:$0xf]
      %v274 = vld [vmem:[%s234 + $0x48] sm:$0xf]
      %v275 = vld [vmem:[%s234 + $0x4c] sm:$0xf]
      %v276 = vld [vmem:[%s234 + $0x50] sm:$0xf]
      %v277 = vld [vmem:[%s234 + $0x54] sm:$0xf]
      %v278 = vld [vmem:[%s234 + $0x58] sm:$0xf]
      %v279 = vld [vmem:[%s234 + $0x5c] sm:$0xf]
      %v280 = vld [vmem:[%s234 + $0x60] sm:$0xf]
      %v281 = vld [vmem:[%s234 + $0x64] sm:$0xf]
      %v282 = vld [vmem:[%s234 + $0x68] sm:$0xf]
      %v283 = vld [vmem:[%s234 + $0x6c] sm:$0xf]
      %v284 = vld [vmem:[%s234 + $0x70] sm:$0xf]
      %v285 = vld [vmem:[%s234 + $0x74] sm:$0xf]
      %v286 = vld [vmem:[%s234 + $0x78] sm:$0xf]
      %v287 = vld [vmem:[%s234 + $0x7c] sm:$0xf]
      %v288 = vld [vmem:[%s239] sm:$0xf]
      %v289 = vld [vmem:[%s239 + $0x4] sm:$0xf]
      %v290 = vld [vmem:[%s239 + $0x8] sm:$0xf]
      %v291 = vld [vmem:[%s239 + $0xc] sm:$0xf]
      %v292 = vld [vmem:[%s239 + $0x10] sm:$0xf]
      %v293 = vld [vmem:[%s239 + $0x14] sm:$0xf]
      %v294 = vld [vmem:[%s239 + $0x18] sm:$0xf]
      %v295 = vld [vmem:[%s239 + $0x1c] sm:$0xf]
      %v296 = vld [vmem:[%s239 + $0x20] sm:$0xf]
      %v297 = vld [vmem:[%s239 + $0x24] sm:$0xf]
      %v298 = vld [vmem:[%s239 + $0x28] sm:$0xf]
      %v299 = vld [vmem:[%s239 + $0x2c] sm:$0xf]
      %v300 = vld [vmem:[%s239 + $0x30] sm:$0xf]
      %v301 = vld [vmem:[%s239 + $0x34] sm:$0xf]
      %v302 = vld [vmem:[%s239 + $0x38] sm:$0xf]
      %v303 = vld [vmem:[%s239 + $0x3c] sm:$0xf]
      %v304 = vld [vmem:[%s242] sm:$0x1]
      %v306 = vperm.slane %v304, 0
      %v340 = vunpack.c.l.b16 %v256
      %v341 = vunpack.c.l.b16 %v257
      %v342 = vunpack.c.l.b16 %v258
      %v343 = vunpack.c.l.b16 %v259
      %v344 = vunpack.c.l.b16 %v260
      %v345 = vunpack.c.l.b16 %v261
      %v346 = vunpack.c.l.b16 %v262
      %v347 = vunpack.c.l.b16 %v263
      %v348 = vunpack.c.l.b16 %v264
      %v349 = vunpack.c.l.b16 %v265
      %v350 = vunpack.c.l.b16 %v266
      %v351 = vunpack.c.l.b16 %v267
      %v352 = vunpack.c.l.b16 %v268
      %v353 = vunpack.c.l.b16 %v269
      %v354 = vunpack.c.l.b16 %v270
      %v355 = vunpack.c.l.b16 %v271
      %v356 = vunpack.c.l.b16 %v272
      %v357 = vunpack.c.l.b16 %v273
      %v358 = vunpack.c.l.b16 %v274
      %v359 = vunpack.c.l.b16 %v275
      %v360 = vunpack.c.l.b16 %v276
      %v361 = vunpack.c.l.b16 %v277
      %v362 = vunpack.c.l.b16 %v278
      %v363 = vunpack.c.l.b16 %v279
      %v364 = vunpack.c.l.b16 %v280
      %v365 = vunpack.c.l.b16 %v281
      %v366 = vunpack.c.l.b16 %v282
      %v367 = vunpack.c.l.b16 %v283
      %v368 = vunpack.c.l.b16 %v284
      %v369 = vunpack.c.l.b16 %v285
      %v370 = vunpack.c.l.b16 %v286
      %v371 = vunpack.c.l.b16 %v287
      %v372 = vpack.c.b16 %v341, %v340
      %v373 = vpack.c.b16 %v343, %v342
      %v374 = vpack.c.b16 %v345, %v344
      %v375 = vpack.c.b16 %v347, %v346
      %v376 = vpack.c.b16 %v349, %v348
      %v377 = vpack.c.b16 %v351, %v350
      %v378 = vpack.c.b16 %v353, %v352
      %v379 = vpack.c.b16 %v355, %v354
      %v380 = vpack.c.b16 %v357, %v356
      %v381 = vpack.c.b16 %v359, %v358
      %v382 = vpack.c.b16 %v361, %v360
      %v383 = vpack.c.b16 %v363, %v362
      %v384 = vpack.c.b16 %v365, %v364
      %v385 = vpack.c.b16 %v367, %v366
      %v386 = vpack.c.b16 %v369, %v368
      %v387 = vpack.c.b16 %v371, %v370
      %v420 = vunpack.c.l.b16 %v288
      %v421 = vunpack.c.l.b16 %v289
      %v422 = vunpack.c.l.b16 %v290
      %v423 = vunpack.c.l.b16 %v291
      %v424 = vunpack.c.l.b16 %v292
      %v425 = vunpack.c.l.b16 %v293
      %v426 = vunpack.c.l.b16 %v294
      %v427 = vunpack.c.l.b16 %v295
      %v428 = vunpack.c.l.b16 %v296
      %v429 = vunpack.c.l.b16 %v297
      %v430 = vunpack.c.l.b16 %v298
      %v431 = vunpack.c.l.b16 %v299
      %v432 = vunpack.c.l.b16 %v300
      %v433 = vunpack.c.l.b16 %v301
      %v434 = vunpack.c.l.b16 %v302
      %v435 = vunpack.c.l.b16 %v303
      %v436 = vpack.c.b16 %v421, %v420
      %v437 = vpack.c.b16 %v423, %v422
      %v438 = vpack.c.b16 %v425, %v424
      %v439 = vpack.c.b16 %v427, %v426
      %v440 = vpack.c.b16 %v429, %v428
      %v441 = vpack.c.b16 %v431, %v430
      %v442 = vpack.c.b16 %v433, %v432
      %v443 = vpack.c.b16 %v435, %v434
      %452 = vmatpush.bf16.msra.mxu0 %v443
      %453 = vmatpush.bf16.msra.mxu0 %v442
      %454 = vmatpush.bf16.msra.mxu0 %v441
      %455 = vmatpush.bf16.msra.mxu0 %v440
      %456 = vmatpush.bf16.msra.mxu0 %v439
      %457 = vmatpush.bf16.msra.mxu0 %v438
      %458 = vmatpush.bf16.msra.mxu0 %v437
      %459 = vmatpush.bf16.msra.mxu0 %v436
      %460 = vmatmul.bf16.gmra.mxu0 %v372
      %v461 = vpop.f32.mrf.mxu0
      %v462 = vadd.f32 %v306, %v461
      %v463 = vpop.f32.mrf.mxu0
      %v464 = vadd.f32 %v306, %v463
      %465 = vmatmul.bf16.gmra.mxu0 %v373
      %v466 = vpop.f32.mrf.mxu0
      %v467 = vadd.f32 %v306, %v466
      %v468 = vpop.f32.mrf.mxu0
      %v469 = vadd.f32 %v306, %v468
      %470 = vmatmul.bf16.gmra.mxu0 %v374
      %v471 = vpop.f32.mrf.mxu0
      %v472 = vadd.f32 %v306, %v471
      %v473 = vpop.f32.mrf.mxu0
      %v474 = vadd.f32 %v306, %v473
      %475 = vmatmul.bf16.gmra.mxu0 %v375
      %v476 = vpop.f32.mrf.mxu0
      %v477 = vadd.f32 %v306, %v476
      %v478 = vpop.f32.mrf.mxu0
      %v479 = vadd.f32 %v306, %v478
      %480 = vmatmul.bf16.gmra.mxu0 %v376
      %v481 = vpop.f32.mrf.mxu0
      %v482 = vadd.f32 %v306, %v481
      %v483 = vpop.f32.mrf.mxu0
      %v484 = vadd.f32 %v306, %v483
      %485 = vmatmul.bf16.gmra.mxu0 %v377
      %v486 = vpop.f32.mrf.mxu0
      %v487 = vadd.f32 %v306, %v486
      %v488 = vpop.f32.mrf.mxu0
      %v489 = vadd.f32 %v306, %v488
      %490 = vmatmul.bf16.gmra.mxu0 %v378
      %v491 = vpop.f32.mrf.mxu0
      %v492 = vadd.f32 %v306, %v491
      %v493 = vpop.f32.mrf.mxu0
      %v494 = vadd.f32 %v306, %v493
      %495 = vmatmul.bf16.gmra.mxu0 %v379
      %v496 = vpop.f32.mrf.mxu0
      %v497 = vadd.f32 %v306, %v496
      %v498 = vpop.f32.mrf.mxu0
      %v499 = vadd.f32 %v306, %v498
      %500 = vmatmul.bf16.gmra.mxu0 %v380
      %v501 = vpop.f32.mrf.mxu0
      %v502 = vadd.f32 %v306, %v501
      %v503 = vpop.f32.mrf.mxu0
      %v504 = vadd.f32 %v306, %v503
      %505 = vmatmul.bf16.gmra.mxu0 %v381
      %v506 = vpop.f32.mrf.mxu0
      %v507 = vadd.f32 %v306, %v506
      %v508 = vpop.f32.mrf.mxu0
      %v509 = vadd.f32 %v306, %v508
      %510 = vmatmul.bf16.gmra.mxu0 %v382
      %v511 = vpop.f32.mrf.mxu0
      %v512 = vadd.f32 %v306, %v511
      %v513 = vpop.f32.mrf.mxu0
      %v514 = vadd.f32 %v306, %v513
      %515 = vmatmul.bf16.gmra.mxu0 %v383
      %v516 = vpop.f32.mrf.mxu0
      %v517 = vadd.f32 %v306, %v516
      %v518 = vpop.f32.mrf.mxu0
      %v519 = vadd.f32 %v306, %v518
      %520 = vmatmul.bf16.gmra.mxu0 %v384
      %v521 = vpop.f32.mrf.mxu0
      %v522 = vadd.f32 %v306, %v521
      %v523 = vpop.f32.mrf.mxu0
      %v524 = vadd.f32 %v306, %v523
      %525 = vmatmul.bf16.gmra.mxu0 %v385
      %v526 = vpop.f32.mrf.mxu0
      %v527 = vadd.f32 %v306, %v526
      %v528 = vpop.f32.mrf.mxu0
      %v529 = vadd.f32 %v306, %v528
      %530 = vmatmul.bf16.gmra.mxu0 %v386
      %v531 = vpop.f32.mrf.mxu0
      %v532 = vadd.f32 %v306, %v531
      %v533 = vpop.f32.mrf.mxu0
      %v534 = vadd.f32 %v306, %v533
      %535 = vmatmul.bf16.gmra.mxu0 %v387
      %v536 = vpop.f32.mrf.mxu0
      %v537 = vadd.f32 %v306, %v536
      %v538 = vpop.f32.mrf.mxu0
      %v539 = vadd.f32 %v306, %v538
      %540 = vdwg.mxu0
      %v541 = vmax.f32 %v462, 0.0
      %v542 = vmax.f32 %v464, 0.0
      %v543 = vmax.f32 %v467, 0.0
      %v544 = vmax.f32 %v469, 0.0
      %v545 = vmax.f32 %v472, 0.0
      %v546 = vmax.f32 %v474, 0.0
      %v547 = vmax.f32 %v477, 0.0
      %v548 = vmax.f32 %v479, 0.0
      %v549 = vmax.f32 %v482, 0.0
      %v550 = vmax.f32 %v484, 0.0
      %v551 = vmax.f32 %v487, 0.0
      %v552 = vmax.f32 %v489, 0.0
      %v553 = vmax.f32 %v492, 0.0
      %v554 = vmax.f32 %v494, 0.0
      %v555 = vmax.f32 %v497, 0.0
      %v556 = vmax.f32 %v499, 0.0
      %v557 = vmax.f32 %v502, 0.0
      %v558 = vmax.f32 %v504, 0.0
      %v559 = vmax.f32 %v507, 0.0
      %v560 = vmax.f32 %v509, 0.0
      %v561 = vmax.f32 %v512, 0.0
      %v562 = vmax.f32 %v514, 0.0
      %v563 = vmax.f32 %v517, 0.0
      %v564 = vmax.f32 %v519, 0.0
      %v565 = vmax.f32 %v522, 0.0
      %v566 = vmax.f32 %v524, 0.0
      %v567 = vmax.f32 %v527, 0.0
      %v568 = vmax.f32 %v529, 0.0
      %v569 = vmax.f32 %v532, 0.0
      %v570 = vmax.f32 %v534, 0.0
      %v571 = vmax.f32 %v537, 0.0
      %v572 = vmax.f32 %v539, 0.0
      %573 = vst [vmem:[%s254] sm:$0xff] %v541
      %574 = vst [vmem:[%s254 + $0x8] sm:$0xff] %v542
      %575 = vst [vmem:[%s254 + $0x10] sm:$0xff] %v543
      %576 = vst [vmem:[%s254 + $0x18] sm:$0xff] %v544
      %577 = vst [vmem:[%s254 + $0x20] sm:$0xff] %v545
      %578 = vst [vmem:[%s254 + $0x28] sm:$0xff] %v546
      %579 = vst [vmem:[%s254 + $0x30] sm:$0xff] %v547
      %580 = vst [vmem:[%s254 + $0x38] sm:$0xff] %v548
      %581 = vst [vmem:[%s254 + $0x40] sm:$0xff] %v549
      %582 = vst [vmem:[%s254 + $0x48] sm:$0xff] %v550
      %583 = vst [vmem:[%s254 + $0x50] sm:$0xff] %v551
      %584 = vst [vmem:[%s254 + $0x58] sm:$0xff] %v552
      %585 = vst [vmem:[%s254 + $0x60] sm:$0xff] %v553
      %586 = vst [vmem:[%s254 + $0x68] sm:$0xff] %v554
      %587 = vst [vmem:[%s254 + $0x70] sm:$0xff] %v555
      %588 = vst [vmem:[%s254 + $0x78] sm:$0xff] %v556
      %589 = vst [vmem:[%s254 + $0x80] sm:$0xff] %v557
      %590 = vst [vmem:[%s254 + $0x88] sm:$0xff] %v558
      %591 = vst [vmem:[%s254 + $0x90] sm:$0xff] %v559
      %592 = vst [vmem:[%s254 + $0x98] sm:$0xff] %v560
      %593 = vst [vmem:[%s254 + $0xa0] sm:$0xff] %v561
      %594 = vst [vmem:[%s254 + $0xa8] sm:$0xff] %v562
      %595 = vst [vmem:[%s254 + $0xb0] sm:$0xff] %v563
      %596 = vst [vmem:[%s254 + $0xb8] sm:$0xff] %v564
      %597 = vst [vmem:[%s254 + $0xc0] sm:$0xff] %v565
      %598 = vst [vmem:[%s254 + $0xc8] sm:$0xff] %v566
      %599 = vst [vmem:[%s254 + $0xd0] sm:$0xff] %v567
      %600 = vst [vmem:[%s254 + $0xd8] sm:$0xff] %v568
      %601 = vst [vmem:[%s254 + $0xe0] sm:$0xff] %v569
      %602 = vst [vmem:[%s254 + $0xe8] sm:$0xff] %v570
      %603 = vst [vmem:[%s254 + $0xf0] sm:$0xff] %v571
      %604 = vst [vmem:[%s254 + $0xf8] sm:$0xff] %v572
      %s605 = smul.u32 32, %s20
      %p606 = scmp.lt.s32.totalorder %s19, 1
      %s607 = scalar_select %p606, %s19, 1
      %p608 = scmp.lt.s32.totalorder %s605, 31
      %s609 = scalar_select %p608, %s605, 31
      %p610 = scmp.lt.s32.totalorder %s21, 0
      %s611 = scalar_select %p610, %s21, 0
      %s612 = sadd.s32 %s611, %s609
      %s613 = smul.addr %s607, 32
      %s614 = sadd.s32 %s612, %s613
      %s615 = smul.addr %s614, 8
      %s616 = scalar_lea.vmem %s3, %s615
      // Predicated region
      $region33: #{convx_forward.1} parent=31 // pred_check
        %p617 = pneg %p135
      $region34: #{convx_forward.1} parent=31 // pred_check_branch
        %619 = sbr.rel (%p617) target = $region36
      $region35: #{convx_forward.1} parent=31 // pred_region
        %s620 = smul.u32 32, %s20
      $region36: #{convx_forward.1} parent=31 // pred_fallthru
        _
    $region32: #{convx_forward.1} parent=5 // pred_fallthru
      _
    %p621 = scmp.le.s32.totalorder 2, %s9
    // Predicated region
    $region37: #{convx_forward.1} parent=5 // pred_check
      %p622 = pneg %p621
    $region38: #{convx_forward.1} parent=5 // pred_check_branch
      %624 = sbr.rel (%p622) target = $region40
    $region39: #{convx_forward.1} parent=5 // pred_region
      %s625 = ssub.s32 %s9, 2
      // Predicated region
      $region41: #{convx_forward.1} parent=39 // pred_check
        %p626 = pneg %p141
      $region42: #{convx_forward.1} parent=39 // pred_check_branch
        %628 = sbr.rel (%p626) target = $region44
      $region43: #{convx_forward.1} parent=39 // pred_region
        %s629 = smul.u32 32, %s23
        %p630 = scmp.lt.s32.totalorder %s22, 1
        %s631 = scalar_select %p630, %s22, 1
        %p632 = scmp.lt.s32.totalorder %s629, 31
        %s633 = scalar_select %p632, %s629, 31
        %p634 = scmp.lt.s32.totalorder %s24, 0
        %s635 = scalar_select %p634, %s24, 0
        %s636 = sadd.s32 %s635, %s633
        %s637 = smul.addr %s631, 32
        %s638 = sadd.s32 %s636, %s637
        %s639 = smul.addr %s638, 8
        %s640 = scalar_lea.vmem %s3, %s639
      $region44: #{convx_forward.1} parent=39 // pred_fallthru
        _
    $region40: #{convx_forward.1} parent=5 // pred_fallthru
      _
  $region6: #{convx_forward.1} parent=0 // loop_footer
    %s13 = sadd.s32 1, %s9
  $region7: #{convx_forward.1} parent=0 // loop_footer_branch
    %8 = sbr.rel target = $region3
  $region8: #{convx_forward.1} parent=0 // loop_exit
    _

</llo_original>
